<compile_context>
chip_gen: v7x
topology: tpu7x:2x2x1
jax: 0.10.0
libtpu: 0.0.40
codegen_flags: <defaults>
</compile_context>

<pallas_src>
import functools
import math

import jax
import jax.numpy as jnp
from jax.experimental import pallas as pl
from jax.experimental.pallas import tpu as pltpu


_TILE_BYTES = 2 * 1024 * 1024  # per-tile budget: safe for v7x's 64 MiB VMEM w/ double-buffering


def make_positional_encoding(d_model: int, max_len: int = 5000) -> jnp.ndarray:
    """Deterministic sin/cos table, identical to the PyTorch buffer (max_len, d_model)."""
    position = jnp.arange(0, max_len, dtype=jnp.float32)[:, None]            # (max_len, 1)
    div_term = jnp.exp(
        jnp.arange(0, d_model, 2, dtype=jnp.float32) * (-math.log(10000.0) / d_model)
    )                                                                         # (d_model//2,)
    angles = position * div_term                                              # (max_len, d_model//2)
    pe = jnp.zeros((max_len, d_model), dtype=jnp.float32)
    pe = pe.at[:, 0::2].set(jnp.sin(angles))
    pe = pe.at[:, 1::2].set(jnp.cos(angles))
    return pe


# ---------------- Pallas kernels ----------------

def _posenc_add_kernel(x_ref, pe_ref, o_ref):
    # pe block is either the same shape as x's block or (1, cols) broadcast over it.
    o_ref[...] = x_ref[...] + pe_ref[...]


def _posenc_add_dropout_kernel(x_ref, pe_ref, bits_ref, o_ref, *, threshold, scale):
    # Inverted dropout fused with the positional-encoding add.
    # keep iff bits >= threshold, keep-prob = 1 - p exactly (integer compare, no f32 bias).
    y = x_ref[...] + pe_ref[...]
    keep = bits_ref[...] >= jnp.uint32(threshold)
    o_ref[...] = jnp.where(keep, y * scale, jnp.zeros_like(y))


# ---------------- tiling helper ----------------

def _largest_divisor_tile(total: int, quantum: int, max_tile: int) -> int:
    """Largest multiple of `quantum` that divides `total` and is <= max_tile.
    Falls back to `total` (full-dim block) if `total` is not a multiple of `quantum`."""
    if total % quantum != 0:
        return total
    best = quantum
    limit = min(total, max(quantum, max_tile))
    for cand in range(quantum, limit + 1, quantum):
        if total % cand == 0:
            best = cand
    return best


# ---------------- wrapper ----------------

def positional_encoding_forward(x, pe, *, dropout_p: float = 0.1,
                                train: bool = False, rng=None):
    """x: (B, S, D); pe: (max_len, D). Returns dropout(x + pe[:S]) with shape (B, S, D)."""
    B, S, D = x.shape
    if S > pe.shape[0]:
        raise ValueError("sequence length exceeds positional-encoding max_len")
    dtype = x.dtype
    pe = pe.astype(dtype)
    itemsize = jnp.dtype(dtype).itemsize

    if D % 128 == 0 and S % 8 == 0:
        # Lane-dense rows of width D; pe rows come straight out of the full table.
        x2 = x.reshape(B * S, D)
        tr = _largest_divisor_tile(S, 8, max(8, _TILE_BYTES // (D * itemsize)))
        n_s = S // tr
        grid = (n_s, B)                              # batch innermost -> pe block index is
        x_index = lambda s, b: (b * n_s + s, 0)      # constant over the inner axis, so the
        pe_index = lambda s, b: (s, 0)               # pe tile stays resident (no re-DMA).
        x_block, pe_block = (tr, D), (tr, D)
        pe_arg = pe                                  # full (max_len, D); no host-side slice
        out2_shape = (B * S, D)
    else:
        # Flatten each batch row to one lane-dense row of width S*D.
        C = S * D
        x2 = x.reshape(B, C)
        tc = _largest_divisor_tile(C, 128, max(128, _TILE_BYTES // (B * itemsize)))
        grid = (C // tc,)
        x_index = lambda c: (0, c)
        pe_index = lambda c: (0, c)
        x_block, pe_block = (B, tc), (1, tc)
        pe_arg = pe[:S, :].reshape(1, C)             # tiny one-time reshape of the table
        out2_shape = (B, C)

    x_spec = pl.BlockSpec(x_block, x_index)
    pe_spec = pl.BlockSpec(pe_block, pe_index)
    o_spec = pl.BlockSpec(x_block, x_index)
    out_shape = jax.ShapeDtypeStruct(out2_shape, dtype)
    cparams = pltpu.CompilerParams(dimension_semantics=("parallel",) * len(grid))

    if (not train) or dropout_p == 0.0:
        out2 = pl.pallas_call(
            _posenc_add_kernel,
            out_shape=out_shape,
            grid=grid,
            in_specs=[x_spec, pe_spec],
            out_specs=o_spec,
            compiler_params=cparams,
        )(x2, pe_arg)
    else:
        if not (0.0 <= dropout_p < 1.0):
            raise ValueError("dropout_p must be in [0, 1)")
        if rng is None:
            rng = jax.random.PRNGKey(0)  # caller should pass a fresh key per step/layer
        bits = jax.random.bits(rng, shape=x2.shape, dtype=jnp.uint32)
        bits_spec = pl.BlockSpec(x_block, x_index)
        threshold = min(int(round(dropout_p * 2.0 ** 32)), 2 ** 32 - 1)
        scale = 1.0 / (1.0 - dropout_p)
        kernel = functools.partial(_posenc_add_dropout_kernel,
                                   threshold=threshold, scale=scale)
        out2 = pl.pallas_call(
            kernel,
            out_shape=out_shape,
            grid=grid,
            in_specs=[x_spec, pe_spec, bits_spec],
            out_specs=o_spec,
            compiler_params=cparams,
        )(x2, pe_arg, bits)

    return out2.reshape(B, S, D)


if __name__ == "__main__":
    key = jax.random.PRNGKey(0)
    kx1, kx2, kdrop = jax.random.split(key, 3)

    # Case A: D not a multiple of 128 -> (B, S*D) lane-dense layout.
    B, S, D, MAX_LEN = 2, 8, 32, 64
    x = jax.random.normal(kx1, (B, S, D), dtype=jnp.float32)
    pe = make_positional_encoding(D, MAX_LEN)

    out = positional_encoding_forward(x, pe, dropout_p=0.1, train=False)
    out = jax.block_until_ready(out)
    ref = x + pe[None, :S, :]
    assert out.shape == (B, S, D)
    assert jnp.allclose(out, ref, atol=1e-6), "eval-mode mismatch (flattened layout)"

    # Training mode: inverted dropout fused with the add.
    p = 0.1
    out_tr = positional_encoding_forward(x, pe, dropout_p=p, train=True, rng=kdrop)
    out_tr = jax.block_until_ready(out_tr)
    scaled = ref * jnp.float32(1.0 / (1.0 - p))
    ok = jnp.isclose(out_tr, 0.0) | jnp.isclose(out_tr, scaled, atol=1e-5)
    assert out_tr.shape == (B, S, D)
    assert bool(jnp.all(ok)), "train-mode output not in {0, (x+pe)/(1-p)}"

    # Case B: D % 128 == 0 -> (B*S, D) layout, pe rows gathered by the BlockSpec index_map.
    B2, S2, D2, MAX_LEN2 = 2, 16, 128, 64
    x2 = jax.random.normal(kx2, (B2, S2, D2), dtype=jnp.float32)
    pe2 = make_positional_encoding(D2, MAX_LEN2)
    out2 = positional_encoding_forward(x2, pe2, dropout_p=0.1, train=False)
    out2 = jax.block_until_ready(out2)
    ref2 = x2 + pe2[None, :S2, :]
    assert jnp.allclose(out2, ref2, atol=1e-6), "eval-mode mismatch (row layout)"

    print("KERNEL_OK")
</pallas_src>

<mosaic_0001>
module attributes {stable_mosaic.version = 11 : i64} {
  func.func @_posenc_add_kernel(%arg0: i32, %arg1: memref<2x256xf32, #tpu.memory_space<vmem>>, %arg2: memref<1x256xf32, #tpu.memory_space<vmem>>, %arg3: memref<2x256xf32, #tpu.memory_space<vmem>>) attributes {dimension_semantics = [#tpu.dimension_semantics<parallel>], iteration_bounds = array<i64: 1>, scalar_prefetch = 0 : i64, scratch_operands = 0 : i64, tpu.core_type = #tpu.core_type<tc>, window_params = [{transform_indices = @transform_0, window_bounds = array<i64: 2, 256>}, {transform_indices = @transform_1, window_bounds = array<i64: 1, 256>}, {transform_indices = @transform_2, window_bounds = array<i64: 2, 256>}]} {
    %c0 = arith.constant 0 : index
    %c0_0 = arith.constant 0 : index
    %0 = vector.load %arg1[%c0, %c0_0] : memref<2x256xf32, #tpu.memory_space<vmem>>, vector<2x256xf32>
    %c0_1 = arith.constant 0 : index
    %c0_2 = arith.constant 0 : index
    %1 = vector.load %arg2[%c0_1, %c0_2] : memref<1x256xf32, #tpu.memory_space<vmem>>, vector<1x256xf32>
    %2 = vector.broadcast %1 : vector<1x256xf32> to vector<2x256xf32>
    %3 = arith.addf %0, %2 : vector<2x256xf32>
    %c0_3 = arith.constant 0 : index
    %c0_4 = arith.constant 0 : index
    %4 = vector.load %arg3[%c0_3, %c0_4] : memref<2x256xf32, #tpu.memory_space<vmem>>, vector<2x256xf32>
    tpu.vector_store %arg3[%c0_3, %c0_4], %3 {strides = array<i32>} : memref<2x256xf32, #tpu.memory_space<vmem>>, vector<2x256xf32>,
    return
  }
  func.func @transform_0(%arg0: i32) -> (i32, i32) {
    %c0_i32 = arith.constant 0 : i32
    %c0_i32_0 = arith.constant 0 : i32
    return %c0_i32, %arg0 : i32, i32
  }
  func.func @transform_1(%arg0: i32) -> (i32, i32) {
    %c0_i32 = arith.constant 0 : i32
    %c0_i32_0 = arith.constant 0 : i32
    return %c0_i32, %arg0 : i32, i32
  }
  func.func @transform_2(%arg0: i32) -> (i32, i32) {
    %c0_i32 = arith.constant 0 : i32
    %c0_i32_0 = arith.constant 0 : i32
    return %c0_i32, %arg0 : i32, i32
  }
}

</mosaic_0001>

<llo_original>
// kernel: tpu_custom_call.1
$region0: #{tpu_custom_call.1}
  #allocation0 [shape = 'u32[]', space=smem, size = 0x4, offset = 0x4, fixed_abs, tag = 'smem constant byte address 0x4 - core index']
  #allocation1 [shape = 'u32[144,128]{1,0:T(1,128)}', space=vmem, size = 0x12000, scoped, tag = 'internal scratch']
  %s0 = inlined_call_operand.hbm [shape: f32[2,256], index: 0, kind: input, shape index: {}]
  %s1 = inlined_call_operand.vmem [shape: f32[1,256], index: 1, kind: input, shape index: {}]
  %s2 = inlined_call_operand.hbm [shape: f32[2,256], index: 2, kind: output, shape index: {}]
  %s3 = sld [smem:[#allocation0]]
  $region22: #{tpu_custom_call.1} parent=0
    _
  %s5 = ssub.s32 1, %s3
  %s6 = scalar_select 0, %s5, %s3
  $region1: #{tpu_custom_call.1} parent=0
    #allocation2 [shape = 'u8[2048]{0}', space=vmem, size = 0x800, scoped, tag = 'input window, operand 0, single buffered']
    #allocation3 [shape = 's32[1]{0}', space=sflag, size = 0x4, scoped, tag = 'scoped memory for tpu_custom_call.1']
    #allocation4 [shape = 's32[1]{0}', space=sflag, size = 0x4, scoped, tag = 'scoped memory for tpu_custom_call.1']
    #allocation5 [shape = 'u8[2048]{0}', space=vmem, size = 0x800, scoped, tag = 'output window, operand 0, single buffered']
    %7 = vsyncpa [#allocation3], 0
    %8 = vsyncpa [#allocation4], 0
    // Predicated region
    $region2: #{tpu_custom_call.1} parent=1 // pred_check
      _
    $region3: #{tpu_custom_call.1} parent=1 // pred_check_branch
      %10 = sbr.rel (0) target = $region5
    $region4: #{tpu_custom_call.1} parent=1 // pred_region
      %s12 = ssub.s32 64, 64
      %13 = vsyncadd [#allocation3], %s12
      %s15 = sshll.u32 [#allocation2], 4
      %s16 = int_to_ptr.vmem [resolvable:$true] %s15
      %18 = dma.hbm_to_vmem [thread:$0]  %s0, 64, %s16, [#allocation3]
    $region5: #{tpu_custom_call.1} parent=1 // pred_fallthru
      _
    // Predicated region
    $region6: #{tpu_custom_call.1} parent=1 // pred_check
      _
    $region7: #{tpu_custom_call.1} parent=1 // pred_check_branch
      %20 = sbr.rel (0) target = $region9
    $region8: #{tpu_custom_call.1} parent=1 // pred_region
      _
    $region9: #{tpu_custom_call.1} parent=1 // pred_fallthru
      _
    // Predicated region
    $region10: #{tpu_custom_call.1} parent=1 // pred_check
      _
    $region11: #{tpu_custom_call.1} parent=1 // pred_check_branch
      %22 = sbr.rel (0) target = $region13
    $region12: #{tpu_custom_call.1} parent=1 // pred_region
      %23 = dma.done [#allocation3], 64
    $region13: #{tpu_custom_call.1} parent=1 // pred_fallthru
      _
    %v24 = vld [vmem:[#allocation2] sm:$0xf]
    %v25 = vld [vmem:[%s1] sm:$0x3]
    %v27 = vlaneseq
    %v28 = vshrl.u32 %v27, 7
    %v29 = vsub.s32 0, %v28
    %v30 = vrot.slane %v25, %v29
    %v31 = vlaneseq
    %v32 = vshrl.u32 %v31, 7
    %v33 = vsub.s32 1, %v32
    %v34 = vrot.slane %v25, %v33
    %v35 = vcombine.low %v30, %v34
    %v37 = vunpack.c.l.s4 1983009808
    %v38 = vunpack.c.0.s8 %v37
    %v39 = vlaneseq
    %v40 = vshrl.u32 %v39, 7
    %v41 = vsub.s32 %v38, %v40
    %v42 = vrot.slane %v35, %v41
    %v44 = vadd.f32 %v24, %v42
    %45 = vst [vmem:[#allocation5] sm:$0xf] %v44
    // Predicated region
    $region14: #{tpu_custom_call.1} parent=1 // pred_check
      _
    $region15: #{tpu_custom_call.1} parent=1 // pred_check_branch
      %47 = sbr.rel (0) target = $region17
    $region16: #{tpu_custom_call.1} parent=1 // pred_region
      %s49 = ssub.s32 64, 64
      %50 = vsyncadd [#allocation4], %s49
      %s52 = sshll.u32 [#allocation5], 4
      %s53 = int_to_ptr.vmem [resolvable:$true] %s52
      %55 = dma.vmem_to_hbm [thread:$0]  %s53, 64, %s2, [#allocation4]
    $region17: #{tpu_custom_call.1} parent=1 // pred_fallthru
      _
    // Predicated region
    $region18: #{tpu_custom_call.1} parent=1 // pred_check
      _
    $region19: #{tpu_custom_call.1} parent=1 // pred_check_branch
      %57 = sbr.rel (0) target = $region21
    $region20: #{tpu_custom_call.1} parent=1 // pred_region
      %58 = dma.done [#allocation4], 64
    $region21: #{tpu_custom_call.1} parent=1 // pred_fallthru
      _
    %59 = vsyncpa [#allocation3], 1
    %60 = vsyncpa [#allocation4], 1

</llo_original>
